<compile_context>
chip_gen: v6e
topology: v6e:2x2x1
jax: 0.10.0
libtpu: 0.0.40
codegen_flags: <defaults>
</compile_context>

<pallas_src>
import jax
import jax.numpy as jnp
from jax.experimental import pallas as pl
from jax.experimental.pallas import tpu as pltpu


def _munet_kernel(obs_ref, w1_ref, w2_ref, w3_ref, b1_ref, b2_ref, b3_ref,
                  out_ref):
    """One batch tile, all agents fused via block-diagonal weights.

    obs_ref : (TB, A*n_obs)        f32 lane-dense obs slab
    w1_ref  : (A*n_obs, A*H1)      bf16, resident (constant block index)
    w2_ref  : (A*H1,  A*H2)        bf16, resident
    w3_ref  : (A*H2,  A*n_act)     bf16, resident
    b1_ref  : (1, A*H1)            f32, resident
    b2_ref  : (1, A*H2)            f32, resident
    b3_ref  : (1, A*n_act)         f32, resident
    out_ref : (TB, A*n_act)        f32 lane-dense output slab
    """
    x = obs_ref[...].astype(jnp.bfloat16)                       # (TB, A*n_obs)

    h1 = jnp.dot(x, w1_ref[...], preferred_element_type=jnp.float32)
    h1 = jnp.maximum(h1 + b1_ref[...], 0.0)                     # (TB, A*H1) f32

    h2 = jnp.dot(h1.astype(jnp.bfloat16), w2_ref[...],
                 preferred_element_type=jnp.float32)
    h2 = jnp.maximum(h2 + b2_ref[...], 0.0)                     # (TB, A*H2) f32

    y = jnp.dot(h2.astype(jnp.bfloat16), w3_ref[...],
                preferred_element_type=jnp.float32)
    out_ref[...] = (y + b3_ref[...]).astype(out_ref.dtype)      # one dense store


def _block_diag(w):
    """(A, K, N) stacked per-agent weights -> (A*K, A*N) block-diagonal.

    Off-diagonal blocks are exact zeros (jnp.zeros + slice-set), so agents
    cannot leak into each other.
    """
    A, K, N = w.shape
    out = jnp.zeros((A * K, A * N), dtype=w.dtype)
    for a in range(A):                      # A is a small static Python int
        out = out.at[a * K:(a + 1) * K, a * N:(a + 1) * N].set(w[a])
    return out


@jax.jit
def munet_forward(obs, w1, b1, w2, b2, w3, b3):
    """obs: (B, A, n_obs) float32.  Returns (B, A, n_act) float32."""
    B, A, n_obs = obs.shape
    H1 = w1.shape[-1]          # 128
    H2 = w2.shape[-1]          # 64
    n_act = w3.shape[-1]

    # Free layout plumbing: merge trailing dims (no transpose, no HBM copy).
    obs2 = obs.reshape(B, A * n_obs)                           # (B, A*n_obs)

    # Block-diagonal bf16 weights (tiny; stay resident in VMEM) and
    # lane-concatenated per-layer f32 biases.
    w1_bd = _block_diag(w1).astype(jnp.bfloat16)               # (A*n_obs, A*H1)
    w2_bd = _block_diag(w2).astype(jnp.bfloat16)               # (A*H1,  A*H2)
    w3_bd = _block_diag(w3).astype(jnp.bfloat16)               # (A*H2,  A*n_act)
    b1_cat = b1.reshape(1, A * H1)                             # (1, A*H1)
    b2_cat = b2.reshape(1, A * H2)                             # (1, A*H2)
    b3_cat = b3.reshape(1, A * n_act)                          # (1, A*n_act)

    # Batch tiling: one tile for small batches; for large (replay-buffer)
    # batches use big tiles but always >= 2 grid steps so the "parallel" axis
    # can shard across v7x's two TensorCores.
    if B <= 256:
        TB = B                                     # block == full array dims
    else:
        TB_MAX = 2048                              # VMEM-safe even on v5e default
        n_tiles = max(2, pl.cdiv(B, TB_MAX))
        TB = ((pl.cdiv(B, n_tiles) + 7) // 8) * 8  # multiple of 8 sublanes
    grid = (pl.cdiv(B, TB),)

    out2 = pl.pallas_call(
        _munet_kernel,
        out_shape=jax.ShapeDtypeStruct((B, A * n_act), jnp.float32),
        grid_spec=pltpu.PrefetchScalarGridSpec(
            num_scalar_prefetch=0,
            grid=grid,
            in_specs=[
                # obs tile: iterates over batch tiles.
                pl.BlockSpec((TB, A * n_obs), lambda i: (i, 0)),
                # Weights / biases: whole arrays, constant block index
                # -> DMA'd once and kept resident in VMEM across the grid.
                pl.BlockSpec((A * n_obs, A * H1), lambda i: (0, 0)),
                pl.BlockSpec((A * H1, A * H2), lambda i: (0, 0)),
                pl.BlockSpec((A * H2, A * n_act), lambda i: (0, 0)),
                pl.BlockSpec((1, A * H1), lambda i: (0, 0)),
                pl.BlockSpec((1, A * H2), lambda i: (0, 0)),
                pl.BlockSpec((1, A * n_act), lambda i: (0, 0)),
            ],
            out_specs=pl.BlockSpec((TB, A * n_act), lambda i: (i, 0)),
        ),
        compiler_params=pltpu.CompilerParams(
            dimension_semantics=("parallel",)),   # batch tiles are independent
    )(obs2, w1_bd, w2_bd, w3_bd, b1_cat, b2_cat, b3_cat)

    # Free split of the last dim back to (B, A, n_act) — matches torch.cat(dim=1).
    return out2.reshape(B, A, n_act)


def _reference_forward(obs, w1, b1, w2, b2, w3, b3):
    """Pure-JAX f32 reference matching the PyTorch module semantics."""
    outs = []
    A = obs.shape[1]
    for a in range(A):
        x = obs[:, a, :]
        h1 = jax.nn.relu(x @ w1[a] + b1[a])
        h2 = jax.nn.relu(h1 @ w2[a] + b2[a])
        outs.append((h2 @ w3[a] + b3[a])[:, None, :])
    return jnp.concatenate(outs, axis=1)


if __name__ == "__main__":
    # Small synthetic problem: 3 agents, 16-dim observations, 8 actions each.
    B, A, N_OBS, N_ACT = 4, 3, 16, 8

    key = jax.random.PRNGKey(0)
    k_obs, k1, k2, k3, k4, k5, k6 = jax.random.split(key, 7)

    obs = jax.random.normal(k_obs, (B, A, N_OBS), dtype=jnp.float32)

    # Deterministic per-agent parameters (stacked along the agent axis).
    w1 = jax.random.normal(k1, (A, N_OBS, 128), dtype=jnp.float32) * 0.1
    b1 = jax.random.normal(k2, (A, 128), dtype=jnp.float32) * 0.1
    w2 = jax.random.normal(k3, (A, 128, 64), dtype=jnp.float32) * 0.1
    b2 = jax.random.normal(k4, (A, 64), dtype=jnp.float32) * 0.1
    w3 = jax.random.normal(k5, (A, 64, N_ACT), dtype=jnp.float32) * 0.1
    b3 = jax.random.normal(k6, (A, N_ACT), dtype=jnp.float32) * 0.1

    out = munet_forward(obs, w1, b1, w2, b2, w3, b3)
    out = jax.block_until_ready(out)

    ref = _reference_forward(obs, w1, b1, w2, b2, w3, b3)
    assert out.shape == (B, A, N_ACT), out.shape
    # bf16 MXU inputs with f32 accumulation -> looser tolerance vs f32 reference.
    assert jnp.allclose(out, ref, atol=2e-2, rtol=2e-2), "mismatch vs reference"

    print("KERNEL_OK")
</pallas_src>

<mosaic_0001>
module attributes {stable_mosaic.version = 11 : i64} {
  func.func @_munet_kernel(%arg0: i32, %arg1: memref<4x48xf32, #tpu.memory_space<vmem>>, %arg2: memref<48x384xbf16, #tpu.memory_space<vmem>>, %arg3: memref<384x192xbf16, #tpu.memory_space<vmem>>, %arg4: memref<192x24xbf16, #tpu.memory_space<vmem>>, %arg5: memref<1x384xf32, #tpu.memory_space<vmem>>, %arg6: memref<1x192xf32, #tpu.memory_space<vmem>>, %arg7: memref<1x24xf32, #tpu.memory_space<vmem>>, %arg8: memref<4x24xf32, #tpu.memory_space<vmem>>) attributes {dimension_semantics = [#tpu.dimension_semantics<parallel>], iteration_bounds = array<i64: 1>, scalar_prefetch = 0 : i64, scratch_operands = 0 : i64, tpu.core_type = #tpu.core_type<tc>, window_params = [{transform_indices = @transform_0, window_bounds = array<i64: 4, 48>}, {pipeline_mode = #tpu.pipeline_mode<synchronous>, transform_indices = @transform_1, window_bounds = array<i64: 48, 384>}, {pipeline_mode = #tpu.pipeline_mode<synchronous>, transform_indices = @transform_2, window_bounds = array<i64: 384, 192>}, {pipeline_mode = #tpu.pipeline_mode<synchronous>, transform_indices = @transform_3, window_bounds = array<i64: 192, 24>}, {pipeline_mode = #tpu.pipeline_mode<synchronous>, transform_indices = @transform_4, window_bounds = array<i64: 1, 384>}, {pipeline_mode = #tpu.pipeline_mode<synchronous>, transform_indices = @transform_5, window_bounds = array<i64: 1, 192>}, {pipeline_mode = #tpu.pipeline_mode<synchronous>, transform_indices = @transform_6, window_bounds = array<i64: 1, 24>}, {transform_indices = @transform_7, window_bounds = array<i64: 4, 24>}]} {
    %c0 = arith.constant 0 : index
    %c0_0 = arith.constant 0 : index
    %0 = vector.load %arg1[%c0, %c0_0] : memref<4x48xf32, #tpu.memory_space<vmem>>, vector<4x48xf32>
    %1 = arith.truncf %0 : vector<4x48xf32> to vector<4x48xbf16>
    %c0_1 = arith.constant 0 : index
    %c0_2 = arith.constant 0 : index
    %2 = vector.load %arg2[%c0_1, %c0_2] : memref<48x384xbf16, #tpu.memory_space<vmem>>, vector<48x384xbf16>
    %cst = arith.constant dense<0.000000e+00> : vector<4x384xf32>
    %3 = tpu.matmul %1, %2, %cst {dimension_numbers = #tpu.dot_dimension_numbers<[1], [0], [0], [1], [0, 0, 1, 1], [], []>} : vector<4x48xbf16>, vector<48x384xbf16>, vector<4x384xf32> -> vector<4x384xf32>
    %c0_3 = arith.constant 0 : index
    %c0_4 = arith.constant 0 : index
    %4 = vector.load %arg5[%c0_3, %c0_4] : memref<1x384xf32, #tpu.memory_space<vmem>>, vector<1x384xf32>
    %5 = vector.broadcast %4 : vector<1x384xf32> to vector<4x384xf32>
    %6 = arith.addf %3, %5 : vector<4x384xf32>
    %cst_5 = arith.constant 0.000000e+00 : f32
    %7 = vector.broadcast %cst_5 : f32 to vector<4x384xf32>
    %8 = arith.maximumf %6, %7 : vector<4x384xf32>
    %9 = arith.truncf %8 : vector<4x384xf32> to vector<4x384xbf16>
    %c0_6 = arith.constant 0 : index
    %c0_7 = arith.constant 0 : index
    %10 = vector.load %arg3[%c0_6, %c0_7] : memref<384x192xbf16, #tpu.memory_space<vmem>>, vector<384x192xbf16>
    %cst_8 = arith.constant dense<0.000000e+00> : vector<4x192xf32>
    %11 = tpu.matmul %9, %10, %cst_8 {dimension_numbers = #tpu.dot_dimension_numbers<[1], [0], [0], [1], [0, 0, 1, 1], [], []>} : vector<4x384xbf16>, vector<384x192xbf16>, vector<4x192xf32> -> vector<4x192xf32>
    %c0_9 = arith.constant 0 : index
    %c0_10 = arith.constant 0 : index
    %12 = vector.load %arg6[%c0_9, %c0_10] : memref<1x192xf32, #tpu.memory_space<vmem>>, vector<1x192xf32>
    %13 = vector.broadcast %12 : vector<1x192xf32> to vector<4x192xf32>
    %14 = arith.addf %11, %13 : vector<4x192xf32>
    %cst_11 = arith.constant 0.000000e+00 : f32
    %15 = vector.broadcast %cst_11 : f32 to vector<4x192xf32>
    %16 = arith.maximumf %14, %15 : vector<4x192xf32>
    %17 = arith.truncf %16 : vector<4x192xf32> to vector<4x192xbf16>
    %c0_12 = arith.constant 0 : index
    %c0_13 = arith.constant 0 : index
    %18 = vector.load %arg4[%c0_12, %c0_13] : memref<192x24xbf16, #tpu.memory_space<vmem>>, vector<192x24xbf16>
    %cst_14 = arith.constant dense<0.000000e+00> : vector<4x24xf32>
    %19 = tpu.matmul %17, %18, %cst_14 {dimension_numbers = #tpu.dot_dimension_numbers<[1], [0], [0], [1], [0, 0, 1, 1], [], []>} : vector<4x192xbf16>, vector<192x24xbf16>, vector<4x24xf32> -> vector<4x24xf32>
    %c0_15 = arith.constant 0 : index
    %c0_16 = arith.constant 0 : index
    %20 = vector.load %arg7[%c0_15, %c0_16] : memref<1x24xf32, #tpu.memory_space<vmem>>, vector<1x24xf32>
    %21 = vector.broadcast %20 : vector<1x24xf32> to vector<4x24xf32>
    %22 = arith.addf %19, %21 : vector<4x24xf32>
    %c0_17 = arith.constant 0 : index
    %c0_18 = arith.constant 0 : index
    %23 = vector.load %arg8[%c0_17, %c0_18] : memref<4x24xf32, #tpu.memory_space<vmem>>, vector<4x24xf32>
    tpu.vector_store %arg8[%c0_17, %c0_18], %22 {strides = array<i32>} : memref<4x24xf32, #tpu.memory_space<vmem>>, vector<4x24xf32>,
    return
  }
  func.func @transform_0(%arg0: i32) -> (i32, i32) {
    %c0_i32 = arith.constant 0 : i32
    %c0_i32_0 = arith.constant 0 : i32
    return %arg0, %c0_i32 : i32, i32
  }
  func.func @transform_1(%arg0: i32) -> (i32, i32) {
    %c0_i32 = arith.constant 0 : i32
    %c0_i32_0 = arith.constant 0 : i32
    %c0_i32_1 = arith.constant 0 : i32
    return %c0_i32, %c0_i32_0 : i32, i32
  }
  func.func @transform_2(%arg0: i32) -> (i32, i32) {
    %c0_i32 = arith.constant 0 : i32
    %c0_i32_0 = arith.constant 0 : i32
    %c0_i32_1 = arith.constant 0 : i32
    return %c0_i32, %c0_i32_0 : i32, i32
  }
  func.func @transform_3(%arg0: i32) -> (i32, i32) {
    %c0_i32 = arith.constant 0 : i32
    %c0_i32_0 = arith.constant 0 : i32
    %c0_i32_1 = arith.constant 0 : i32
    return %c0_i32, %c0_i32_0 : i32, i32
  }
  func.func @transform_4(%arg0: i32) -> (i32, i32) {
    %c0_i32 = arith.constant 0 : i32
    %c0_i32_0 = arith.constant 0 : i32
    %c0_i32_1 = arith.constant 0 : i32
    return %c0_i32, %c0_i32_0 : i32, i32
  }
  func.func @transform_5(%arg0: i32) -> (i32, i32) {
    %c0_i32 = arith.constant 0 : i32
    %c0_i32_0 = arith.constant 0 : i32
    %c0_i32_1 = arith.constant 0 : i32
    return %c0_i32, %c0_i32_0 : i32, i32
  }
  func.func @transform_6(%arg0: i32) -> (i32, i32) {
    %c0_i32 = arith.constant 0 : i32
    %c0_i32_0 = arith.constant 0 : i32
    %c0_i32_1 = arith.constant 0 : i32
    return %c0_i32, %c0_i32_0 : i32, i32
  }
  func.func @transform_7(%arg0: i32) -> (i32, i32) {
    %c0_i32 = arith.constant 0 : i32
    %c0_i32_0 = arith.constant 0 : i32
    return %arg0, %c0_i32 : i32, i32
  }
}

</mosaic_0001>

<llo_original>
// kernel: munet_forward.1
$region0: #{munet_forward.1}
  #allocation0 [shape = 'u32[]', space=smem, size = 0x4, offset = 0x4, fixed_abs, tag = 'smem constant byte address 0x4 - core index']
  #allocation1 [shape = 'u32[144,128]{1,0:T(1,128)}', space=vmem, size = 0x12000, scoped, tag = 'internal scratch']
  %s0 = inlined_call_operand.vmem [shape: f32[4,48], index: 0, kind: input, shape index: {}]
  %s1 = inlined_call_operand.vmem [shape: bf16[48,384], index: 1, kind: input, shape index: {}]
  %s2 = inlined_call_operand.vmem [shape: bf16[384,192], index: 2, kind: input, shape index: {}]
  %s3 = inlined_call_operand.vmem [shape: bf16[192,24], index: 3, kind: input, shape index: {}]
  %s4 = inlined_call_operand.vmem [shape: f32[1,384], index: 4, kind: input, shape index: {}]
  %s5 = inlined_call_operand.vmem [shape: f32[1,192], index: 5, kind: input, shape index: {}]
  %s6 = inlined_call_operand.vmem [shape: f32[1,24], index: 6, kind: input, shape index: {}]
  %s7 = inlined_call_operand.vmem [shape: f32[4,24], index: 7, kind: output, shape index: {}]
  %s8 = sld [smem:[#allocation0]]
  $region38: #{munet_forward.1} parent=0
    _
  %s10 = ssub.s32 1, %s8
  %s11 = scalar_select 0, %s10, %s8
  // Predicated region
  $region2: #{munet_forward.1} parent=0 // pred_check
    _
  $region3: #{munet_forward.1} parent=0 // pred_check_branch
    %13 = sbr.rel (0) target = $region5
  $region4: #{munet_forward.1} parent=0 // pred_region
    _
  $region5: #{munet_forward.1} parent=0 // pred_fallthru
    _
  // Predicated region
  $region6: #{munet_forward.1} parent=0 // pred_check
    _
  $region7: #{munet_forward.1} parent=0 // pred_check_branch
    %15 = sbr.rel (0) target = $region9
  $region8: #{munet_forward.1} parent=0 // pred_region
    _
  $region9: #{munet_forward.1} parent=0 // pred_fallthru
    _
  // Predicated region
  $region10: #{munet_forward.1} parent=0 // pred_check
    _
  $region11: #{munet_forward.1} parent=0 // pred_check_branch
    %17 = sbr.rel (0) target = $region13
  $region12: #{munet_forward.1} parent=0 // pred_region
    _
  $region13: #{munet_forward.1} parent=0 // pred_fallthru
    _
  // Predicated region
  $region14: #{munet_forward.1} parent=0 // pred_check
    _
  $region15: #{munet_forward.1} parent=0 // pred_check_branch
    %19 = sbr.rel (0) target = $region17
  $region16: #{munet_forward.1} parent=0 // pred_region
    _
  $region17: #{munet_forward.1} parent=0 // pred_fallthru
    _
  // Predicated region
  $region18: #{munet_forward.1} parent=0 // pred_check
    _
  $region19: #{munet_forward.1} parent=0 // pred_check_branch
    %21 = sbr.rel (0) target = $region21
  $region20: #{munet_forward.1} parent=0 // pred_region
    _
  $region21: #{munet_forward.1} parent=0 // pred_fallthru
    _
  // Predicated region
  $region22: #{munet_forward.1} parent=0 // pred_check
    _
  $region23: #{munet_forward.1} parent=0 // pred_check_branch
    %23 = sbr.rel (0) target = $region25
  $region24: #{munet_forward.1} parent=0 // pred_region
    _
  $region25: #{munet_forward.1} parent=0 // pred_fallthru
    _
  // Predicated region
  $region26: #{munet_forward.1} parent=0 // pred_check
    _
  $region27: #{munet_forward.1} parent=0 // pred_check_branch
    %25 = sbr.rel (0) target = $region29
  $region28: #{munet_forward.1} parent=0 // pred_region
    _
  $region29: #{munet_forward.1} parent=0 // pred_fallthru
    _
  %v27 = vld [vmem:[%s0] sm:$0xf]
  %v28 = vpack.c.bf16 %v27, %v27
  %v29 = vld [vmem:[%s1] sm:$0xff]
  %v30 = vld [vmem:[%s1 + $0x8] sm:$0xf]
  %v31 = vld [vmem:[%s1 + $0xc] sm:$0xff]
  %v32 = vld [vmem:[%s1 + $0x14] sm:$0xf]
  %v33 = vld [vmem:[%s1 + $0x18] sm:$0xff]
  %v34 = vld [vmem:[%s1 + $0x20] sm:$0xf]
  %v35 = vld [vmem:[%s1 + $0x24] sm:$0xff]
  %v36 = vld [vmem:[%s1 + $0x2c] sm:$0xf]
  %v37 = vld [vmem:[%s1 + $0x30] sm:$0xff]
  %v38 = vld [vmem:[%s1 + $0x38] sm:$0xf]
  %v39 = vld [vmem:[%s1 + $0x3c] sm:$0xff]
  %v40 = vld [vmem:[%s1 + $0x44] sm:$0xf]
  %v41 = vld [vmem:[%s4] sm:$0x7]
  %v43 = vlaneseq
  %v44 = vshrl.u32 %v43, 7
  %v45 = vsub.s32 0, %v44
  %v46 = vrot.slane %v41, %v45
  %v47 = vlaneseq
  %v48 = vshrl.u32 %v47, 7
  %v49 = vsub.s32 1, %v48
  %v50 = vrot.slane %v41, %v49
  %v51 = vlaneseq
  %v52 = vshrl.u32 %v51, 7
  %v53 = vsub.s32 2, %v52
  %v54 = vrot.slane %v41, %v53
  %v70 = vunpack.c.l.b16 %v29
  %v71 = vunpack.c.h.b16 %v29
  %v72 = vunpack.c.l.b16 %v30
  %v73 = vunpack.c.l.b16 %v31
  %v74 = vunpack.c.h.b16 %v31
  %v75 = vunpack.c.l.b16 %v32
  %v76 = vunpack.c.l.b16 %v33
  %v77 = vunpack.c.h.b16 %v33
  %v78 = vunpack.c.l.b16 %v34
  %v79 = vunpack.c.l.b16 %v35
  %v80 = vunpack.c.h.b16 %v35
  %v81 = vunpack.c.l.b16 %v36
  %v82 = vunpack.c.l.b16 %v37
  %v83 = vunpack.c.h.b16 %v37
  %v84 = vunpack.c.l.b16 %v38
  %v85 = vunpack.c.l.b16 %v39
  %v86 = vunpack.c.h.b16 %v39
  %v87 = vunpack.c.l.b16 %v40
  %v88 = vpack.c.b16 %v73, %v70
  %v89 = vpack.c.b16 %v74, %v71
  %v90 = vpack.c.b16 %v75, %v72
  %v91 = vpack.c.b16 %v79, %v76
  %v92 = vpack.c.b16 %v80, %v77
  %v93 = vpack.c.b16 %v81, %v78
  %v94 = vpack.c.b16 %v85, %v82
  %v95 = vpack.c.b16 %v86, %v83
  %v96 = vpack.c.b16 %v87, %v84
  %vm106 = vcmask 392192
  %v108 = vsel %vm106, %v28, 0
  %110 = vmatprep.subr.bf16.mxu0 0
  %111 = vmatpush1.bf16.msra.mxu0 0
  %112 = vmatprep.subr.bf16.mxu0 0
  %113 = vmatpush1.bf16.msra.mxu0 0
  %114 = vmatprep.subr.bf16.mxu0 0
  %115 = vmatpush1.bf16.msra.mxu0 0
  %116 = vmatprep.subr.bf16.mxu0 0
  %117 = vmatpush1.bf16.msra.mxu0 0
  %118 = vmatprep.subr.bf16.mxu0 0
  %119 = vmatpush1.bf16.msra.mxu0 0
  %120 = vmatprep.subr.bf16.mxu0 %v95
  %121 = vmatpush1.bf16.msra.mxu0 %v94
  %122 = vmatprep.subr.bf16.mxu0 %v92
  %123 = vmatpush1.bf16.msra.mxu0 %v91
  %124 = vmatprep.subr.bf16.mxu0 %v89
  %125 = vmatpush1.bf16.msra.mxu0 %v88
  %126 = vmatprep.subr.bf16.mxu0 0
  %127 = vmatpush2.bf16.msra.mxu0 0
  %128 = vmatprep.subr.bf16.mxu0 0
  %129 = vmatpush2.bf16.msra.mxu0 0
  %130 = vmatprep.subr.bf16.mxu0 0
  %131 = vmatpush2.bf16.msra.mxu0 0
  %132 = vmatprep.subr.bf16.mxu0 0
  %133 = vmatpush2.bf16.msra.mxu0 0
  %134 = vmatprep.subr.bf16.mxu0 0
  %135 = vmatpush2.bf16.msra.mxu0 0
  %136 = vmatprep.subr.bf16.mxu0 0
  %137 = vmatpush2.bf16.msra.mxu0 0
  %138 = vmatprep.subr.bf16.mxu0 0
  %139 = vmatpush2.bf16.msra.mxu0 0
  %140 = vmatprep.subr.bf16.mxu0 0
  %141 = vmatpush2.bf16.msra.mxu0 0
  %142 = vmatprep.mubr.bf16.mxu0 0
  %143 = vmatmul.mubr.bf16.gmra.mxu0 %v108
  %v144 = vpop.f32.mrf.mxu0
  %v145 = vadd.f32 %v46, %v144
  %v146 = vpop.f32.mrf.mxu0
  %v147 = vadd.f32 %v50, %v146
  %v148 = vpop.f32.mrf.mxu0
  %v149 = vpop.f32.mrf.mxu0
  %150 = vdwg.mxu0
  %151 = vmatprep.subr.bf16.mxu0 0
  %152 = vmatpush1.bf16.msra.mxu0 0
  %153 = vmatprep.subr.bf16.mxu0 0
  %154 = vmatpush1.bf16.msra.mxu0 0
  %155 = vmatprep.subr.bf16.mxu0 0
  %156 = vmatpush1.bf16.msra.mxu0 0
  %157 = vmatprep.subr.bf16.mxu0 0
  %158 = vmatpush1.bf16.msra.mxu0 0
  %159 = vmatprep.subr.bf16.mxu0 0
  %160 = vmatpush1.bf16.msra.mxu0 0
  %161 = vmatprep.subr.bf16.mxu0 0
  %162 = vmatpush1.bf16.msra.mxu0 %v96
  %163 = vmatprep.subr.bf16.mxu0 0
  %164 = vmatpush1.bf16.msra.mxu0 %v93
  %165 = vmatprep.subr.bf16.mxu0 0
  %166 = vmatpush1.bf16.msra.mxu0 %v90
  %167 = vmatprep.subr.bf16.mxu0 0
  %168 = vmatpush2.bf16.msra.mxu0 0
  %169 = vmatprep.subr.bf16.mxu0 0
  %170 = vmatpush2.bf16.msra.mxu0 0
  %171 = vmatprep.subr.bf16.mxu0 0
  %172 = vmatpush2.bf16.msra.mxu0 0
  %173 = vmatprep.subr.bf16.mxu0 0
  %174 = vmatpush2.bf16.msra.mxu0 0
  %175 = vmatprep.subr.bf16.mxu0 0
  %176 = vmatpush2.bf16.msra.mxu0 0
  %177 = vmatprep.subr.bf16.mxu0 0
  %178 = vmatpush2.bf16.msra.mxu0 0
  %179 = vmatprep.subr.bf16.mxu0 0
  %180 = vmatpush2.bf16.msra.mxu0 0
  %181 = vmatprep.subr.bf16.mxu0 0
  %182 = vmatpush2.bf16.msra.mxu0 0
  %183 = vmatprep.mubr.bf16.mxu0 0
  %184 = vmatmul.mubr.bf16.gmra.mxu0 %v108
  %v185 = vpop.f32.mrf.mxu0
  %v186 = vadd.f32 %v54, %v185
  %v187 = vpop.f32.mrf.mxu0
  %v188 = vpop.f32.mrf.mxu0
  %v189 = vpop.f32.mrf.mxu0
  %190 = vdwg.mxu0
  %v191 = vmax.f32 %v145, 0.0
  %v192 = vmax.f32 %v147, 0.0
  %v193 = vmax.f32 %v186, 0.0
  %v194 = vpack.c.bf16 %v191, %v191
  %v195 = vpack.c.bf16 %v192, %v192
  %v196 = vpack.c.bf16 %v193, %v193
  %v197 = vld [vmem:[%s2] sm:$0xff]
  %v198 = vld [vmem:[%s2 + $0x8] sm:$0xff]
  %v199 = vld [vmem:[%s2 + $0x10] sm:$0xff]
  %v200 = vld [vmem:[%s2 + $0x18] sm:$0xff]
  %v201 = vld [vmem:[%s2 + $0x20] sm:$0xff]
  %v202 = vld [vmem:[%s2 + $0x28] sm:$0xff]
  %v203 = vld [vmem:[%s2 + $0x30] sm:$0xff]
  %v204 = vld [vmem:[%s2 + $0x38] sm:$0xff]
  %v205 = vld [vmem:[%s2 + $0x40] sm:$0xff]
  %v206 = vld [vmem:[%s2 + $0x48] sm:$0xff]
  %v207 = vld [vmem:[%s2 + $0x50] sm:$0xff]
  %v208 = vld [vmem:[%s2 + $0x58] sm:$0xff]
  %v209 = vld [vmem:[%s2 + $0x60] sm:$0xff]
  %v210 = vld [vmem:[%s2 + $0x68] sm:$0xff]
  %v211 = vld [vmem:[%s2 + $0x70] sm:$0xff]
  %v212 = vld [vmem:[%s2 + $0x78] sm:$0xff]
  %v213 = vld [vmem:[%s2 + $0x80] sm:$0xff]
  %v214 = vld [vmem:[%s2 + $0x88] sm:$0xff]
  %v215 = vld [vmem:[%s2 + $0x90] sm:$0xff]
  %v216 = vld [vmem:[%s2 + $0x98] sm:$0xff]
  %v217 = vld [vmem:[%s2 + $0xa0] sm:$0xff]
  %v218 = vld [vmem:[%s2 + $0xa8] sm:$0xff]
  %v219 = vld [vmem:[%s2 + $0xb0] sm:$0xff]
  %v220 = vld [vmem:[%s2 + $0xb8] sm:$0xff]
  %v221 = vld [vmem:[%s2 + $0xc0] sm:$0xff]
  %v222 = vld [vmem:[%s2 + $0xc8] sm:$0xff]
  %v223 = vld [vmem:[%s2 + $0xd0] sm:$0xff]
  %v224 = vld [vmem:[%s2 + $0xd8] sm:$0xff]
  %v225 = vld [vmem:[%s2 + $0xe0] sm:$0xff]
  %v226 = vld [vmem:[%s2 + $0xe8] sm:$0xff]
  %v227 = vld [vmem:[%s2 + $0xf0] sm:$0xff]
  %v228 = vld [vmem:[%s2 + $0xf8] sm:$0xff]
  %v229 = vld [vmem:[%s2 + $0x100] sm:$0xff]
  %v230 = vld [vmem:[%s2 + $0x108] sm:$0xff]
  %v231 = vld [vmem:[%s2 + $0x110] sm:$0xff]
  %v232 = vld [vmem:[%s2 + $0x118] sm:$0xff]
  %v233 = vld [vmem:[%s2 + $0x120] sm:$0xff]
  %v234 = vld [vmem:[%s2 + $0x128] sm:$0xff]
  %v235 = vld [vmem:[%s2 + $0x130] sm:$0xff]
  %v236 = vld [vmem:[%s2 + $0x138] sm:$0xff]
  %v237 = vld [vmem:[%s2 + $0x140] sm:$0xff]
  %v238 = vld [vmem:[%s2 + $0x148] sm:$0xff]
  %v239 = vld [vmem:[%s2 + $0x150] sm:$0xff]
  %v240 = vld [vmem:[%s2 + $0x158] sm:$0xff]
  %v241 = vld [vmem:[%s2 + $0x160] sm:$0xff]
  %v242 = vld [vmem:[%s2 + $0x168] sm:$0xff]
  %v243 = vld [vmem:[%s2 + $0x170] sm:$0xff]
  %v244 = vld [vmem:[%s2 + $0x178] sm:$0xff]
  %v245 = vld [vmem:[%s5] sm:$0x3]
  %v247 = vlaneseq
  %v248 = vshrl.u32 %v247, 7
  %v249 = vsub.s32 0, %v248
  %v250 = vrot.slane %v245, %v249
  %v251 = vlaneseq
  %v252 = vshrl.u32 %v251, 7
  %v253 = vsub.s32 1, %v252
  %v254 = vrot.slane %v245, %v253
  %v305 = vunpack.c.l.b16 %v197
  %v306 = vunpack.c.h.b16 %v197
  %v307 = vunpack.c.l.b16 %v198
  %v308 = vunpack.c.h.b16 %v198
  %v309 = vunpack.c.l.b16 %v199
  %v310 = vunpack.c.h.b16 %v199
  %v311 = vunpack.c.l.b16 %v200
  %v312 = vunpack.c.h.b16 %v200
  %v313 = vunpack.c.l.b16 %v201
  %v314 = vunpack.c.h.b16 %v201
  %v315 = vunpack.c.l.b16 %v202
  %v316 = vunpack.c.h.b16 %v202
  %v317 = vunpack.c.l.b16 %v203
  %v318 = vunpack.c.h.b16 %v203
  %v319 = vunpack.c.l.b16 %v204
  %v320 = vunpack.c.h.b16 %v204
  %v321 = vunpack.c.l.b16 %v205
  %v322 = vunpack.c.h.b16 %v205
  %v323 = vunpack.c.l.b16 %v206
  %v324 = vunpack.c.h.b16 %v206
  %v325 = vunpack.c.l.b16 %v207
  %v326 = vunpack.c.h.b16 %v207
  %v327 = vunpack.c.l.b16 %v208
  %v328 = vunpack.c.h.b16 %v208
  %v329 = vunpack.c.l.b16 %v209
  %v330 = vunpack.c.h.b16 %v209
  %v331 = vunpack.c.l.b16 %v210
  %v332 = vunpack.c.h.b16 %v210
  %v333 = vunpack.c.l.b16 %v211
  %v334 = vunpack.c.h.b16 %v211
  %v335 = vunpack.c.l.b16 %v212
  %v336 = vunpack.c.h.b16 %v212
  %v337 = vunpack.c.l.b16 %v213
  %v338 = vunpack.c.h.b16 %v213
  %v339 = vunpack.c.l.b16 %v214
  %v340 = vunpack.c.h.b16 %v214
  %v341 = vunpack.c.l.b16 %v215
  %v342 = vunpack.c.h.b16 %v215
  %v343 = vunpack.c.l.b16 %v216
  %v344 = vunpack.c.h.b16 %v216
  %v345 = vunpack.c.l.b16 %v217
  %v346 = vunpack.c.h.b16 %v217
  %v347 = vunpack.c.l.b16 %v218
  %v348 = vunpack.c.h.b16 %v218
  %v349 = vunpack.c.l.b16 %v219
  %v350 = vunpack.c.h.b16 %v219
  %v351 = vunpack.c.l.b16 %v220
  %v352 = vunpack.c.h.b16 %v220
  %v353 = vunpack.c.l.b16 %v221
  %v354 = vunpack.c.h.b16 %v221
  %v355 = vunpack.c.l.b16 %v222
  %v356 = vunpack.c.h.b16 %v222
  %v357 = vunpack.c.l.b16 %v223
  %v358 = vunpack.c.h.b16 %v223
  %v359 = vunpack.c.l.b16 %v224
  %v360 = vunpack.c.h.b16 %v224
  %v361 = vunpack.c.l.b16 %v225
  %v362 = vunpack.c.h.b16 %v225
  %v363 = vunpack.c.l.b16 %v226
  %v364 = vunpack.c.h.b16 %v226
  %v365 = vunpack.c.l.b16 %v227
  %v366 = vunpack.c.h.b16 %v227
  %v367 = vunpack.c.l.b16 %v228
  %v368 = vunpack.c.h.b16 %v228
  %v369 = vunpack.c.l.b16 %v229
  %v370 = vunpack.c.h.b16 %v229
  %v371 = vunpack.c.l.b16 %v230
  %v372 = vunpack.c.h.b16 %v230
  %v373 = vunpack.c.l.b16 %v231
  %v374 = vunpack.c.h.b16 %v231
  %v375 = vunpack.c.l.b16 %v232
  %v376 = vunpack.c.h.b16 %v232
  %v377 = vunpack.c.l.b16 %v233
  %v378 = vunpack.c.h.b16 %v233
  %v379 = vunpack.c.l.b16 %v234
  %v380 = vunpack.c.h.b16 %v234
  %v381 = vunpack.c.l.b16 %v235
  %v382 = vunpack.c.h.b16 %v235
  %v383 = vunpack.c.l.b16 %v236
  %v384 = vunpack.c.h.b16 %v236
  %v385 = vunpack.c.l.b16 %v237
  %v386 = vunpack.c.h.b16 %v237
  %v387 = vunpack.c.l.b16 %v238
  %v388 = vunpack.c.h.b16 %v238
  %v389 = vunpack.c.l.b16 %v239
  %v390 = vunpack.c.h.b16 %v239
  %v391 = vunpack.c.l.b16 %v240
  %v392 = vunpack.c.h.b16 %v240
  %v393 = vunpack.c.l.b16 %v241
  %v394 = vunpack.c.h.b16 %v241
  %v395 = vunpack.c.l.b16 %v242
  %v396 = vunpack.c.h.b16 %v242
  %v397 = vunpack.c.l.b16 %v243
  %v398 = vunpack.c.h.b16 %v243
  %v399 = vunpack.c.l.b16 %v244
  %v400 = vunpack.c.h.b16 %v244
  %v401 = vpack.c.b16 %v307, %v305
  %v402 = vpack.c.b16 %v308, %v306
  %v403 = vpack.c.b16 %v311, %v309
  %v404 = vpack.c.b16 %v312, %v310
  %v405 = vpack.c.b16 %v315, %v313
  %v406 = vpack.c.b16 %v316, %v314
  %v407 = vpack.c.b16 %v319, %v317
  %v408 = vpack.c.b16 %v320, %v318
  %v409 = vpack.c.b16 %v323, %v321
  %v410 = vpack.c.b16 %v324, %v322
  %v411 = vpack.c.b16 %v327, %v325
  %v412 = vpack.c.b16 %v328, %v326
  %v413 = vpack.c.b16 %v331, %v329
  %v414 = vpack.c.b16 %v332, %v330
  %v415 = vpack.c.b16 %v335, %v333
  %v416 = vpack.c.b16 %v336, %v334
  %v417 = vpack.c.b16 %v339, %v337
  %v418 = vpack.c.b16 %v340, %v338
  %v419 = vpack.c.b16 %v343, %v341
  %v420 = vpack.c.b16 %v344, %v342
  %v421 = vpack.c.b16 %v347, %v345
  %v422 = vpack.c.b16 %v348, %v346
  %v423 = vpack.c.b16 %v351, %v349
  %v424 = vpack.c.b16 %v352, %v350
  %v425 = vpack.c.b16 %v355, %v353
  %v426 = vpack.c.b16 %v356, %v354
  %v427 = vpack.c.b16 %v359, %v357
  %v428 = vpack.c.b16 %v360, %v358
  %v429 = vpack.c.b16 %v363, %v361
  %v430 = vpack.c.b16 %v364, %v362
  %v431 = vpack.c.b16 %v367, %v365
  %v432 = vpack.c.b16 %v368, %v366
  %v433 = vpack.c.b16 %v371, %v369
  %v434 = vpack.c.b16 %v372, %v370
  %v435 = vpack.c.b16 %v375, %v373
  %v436 = vpack.c.b16 %v376, %v374
  %v437 = vpack.c.b16 %v379, %v377
  %v438 = vpack.c.b16 %v380, %v378
  %v439 = vpack.c.b16 %v383, %v381
  %v440 = vpack.c.b16 %v384, %v382
  %v441 = vpack.c.b16 %v387, %v385
  %v442 = vpack.c.b16 %v388, %v386
  %v443 = vpack.c.b16 %v391, %v389
  %v444 = vpack.c.b16 %v392, %v390
  %v445 = vpack.c.b16 %v395, %v393
  %v446 = vpack.c.b16 %v396, %v394
  %v447 = vpack.c.b16 %v399, %v397
  %v448 = vpack.c.b16 %v400, %v398
  %497 = vmatprep.subr.bf16.mxu0 %v416
  %498 = vmatpush1.bf16.msra.mxu0 %v415
  %499 = vmatprep.subr.bf16.mxu0 %v414
  %500 = vmatpush1.bf16.msra.mxu0 %v413
  %501 = vmatprep.subr.bf16.mxu0 %v412
  %502 = vmatpush1.bf16.msra.mxu0 %v411
  %503 = vmatprep.subr.bf16.mxu0 %v410
  %504 = vmatpush1.bf16.msra.mxu0 %v409
  %505 = vmatprep.subr.bf16.mxu0 %v408
  %506 = vmatpush1.bf16.msra.mxu0 %v407
  %507 = vmatprep.subr.bf16.mxu0 %v406
  %508 = vmatpush1.bf16.msra.mxu0 %v405
  %509 = vmatprep.subr.bf16.mxu0 %v404
  %510 = vmatpush1.bf16.msra.mxu0 %v403
  %511 = vmatprep.subr.bf16.mxu0 %v402
  %512 = vmatpush1.bf16.msra.mxu0 %v401
  %513 = vmatprep.subr.bf16.mxu0 %v432
  %514 = vmatpush2.bf16.msra.mxu0 %v431
  %515 = vmatprep.subr.bf16.mxu0 %v430
  %516 = vmatpush2.bf16.msra.mxu0 %v429
  %517 = vmatprep.subr.bf16.mxu0 %v428
  %518 = vmatpush2.bf16.msra.mxu0 %v427
  %519 = vmatprep.subr.bf16.mxu0 %v426
  %520 = vmatpush2.bf16.msra.mxu0 %v425
  %521 = vmatprep.subr.bf16.mxu0 %v424
  %522 = vmatpush2.bf16.msra.mxu0 %v423
  %523 = vmatprep.subr.bf16.mxu0 %v422
  %524 = vmatpush2.bf16.msra.mxu0 %v421
  %525 = vmatprep.subr.bf16.mxu0 %v420
  %526 = vmatpush2.bf16.msra.mxu0 %v419
  %527 = vmatprep.subr.bf16.mxu0 %v418
  %528 = vmatpush2.bf16.msra.mxu0 %v417
  %529 = vmatprep.mubr.bf16.mxu0 %v195
  %530 = vmatmul.mubr.bf16.gmra.mxu0 %v194
  %v531 = vpop.f32.mrf.mxu0
  %v532 = vadd.f32 %v250, %v531
  %v533 = vpop.f32.mrf.mxu0
  %v534 = vadd.f32 %v254, %v533
  %v535 = vpop.f32.mrf.mxu0
  %v536 = vpop.f32.mrf.mxu0
  %537 = vdwg.mxu0
  %538 = vmatprep.subr.bf16.mxu0 %v448
  %539 = vmatpush1.bf16.msra.mxu0 %v447
  %540 = vmatprep.subr.bf16.mxu0 %v446
  %541 = vmatpush1.bf16.msra.mxu0 %v445
  %542 = vmatprep.subr.bf16.mxu0 %v444
  %543 = vmatpush1.bf16.msra.mxu0 %v443
  %544 = vmatprep.subr.bf16.mxu0 %v442
  %545 = vmatpush1.bf16.msra.mxu0 %v441
  %546 = vmatprep.subr.bf16.mxu0 %v440
  %547 = vmatpush1.bf16.msra.mxu0 %v439
  %548 = vmatprep.subr.bf16.mxu0 %v438
  %549 = vmatpush1.bf16.msra.mxu0 %v437
  %550 = vmatprep.subr.bf16.mxu0 %v436
  %551 = vmatpush1.bf16.msra.mxu0 %v435
  %552 = vmatprep.subr.bf16.mxu0 %v434
  %553 = vmatpush1.bf16.msra.mxu0 %v433
  %554 = vmatprep.subr.bf16.mxu0 0
  %555 = vmatpush2.bf16.msra.mxu0 0
  %556 = vmatprep.subr.bf16.mxu0 0
  %557 = vmatpush2.bf16.msra.mxu0 0
  %558 = vmatprep.subr.bf16.mxu0 0
  %559 = vmatpush2.bf16.msra.mxu0 0
  %560 = vmatprep.subr.bf16.mxu0 0
  %561 = vmatpush2.bf16.msra.mxu0 0
  %562 = vmatprep.subr.bf16.mxu0 0
  %563 = vmatpush2.bf16.msra.mxu0 0
  %564 = vmatprep.subr.bf16.mxu0 0
  %565 = vmatpush2.bf16.msra.mxu0 0
  %566 = vmatprep.subr.bf16.mxu0 0
  %567 = vmatpush2.bf16.msra.mxu0 0
  %568 = vmatprep.subr.bf16.mxu0 0
  %569 = vmatpush2.bf16.msra.mxu0 0
  %570 = vmatprep.mubr.bf16.mxu0 0
  %571 = vmatmul.mubr.bf16.gmra.mxu0 %v196
  %v572 = vpop.f32.mrf.mxu0
  %v573 = vadd.f32 %v532, %v572
  %v574 = vpop.f32.mrf.mxu0
  %v575 = vadd.f32 %v534, %v574
  %v576 = vpop.f32.mrf.mxu0
  %v577 = vpop.f32.mrf.mxu0
  %578 = vdwg.mxu0
  %v579 = vmax.f32 %v573, 0.0
  %v580 = vmax.f32 %v575, 0.0
  %v581 = vpack.c.bf16 %v579, %v579
  %v582 = vpack.c.bf16 %v580, %v580
  %v583 = vld [vmem:[%s3] sm:$0xf]
  %v584 = vld [vmem:[%s3 + $0x4] sm:$0xf]
  %v585 = vld [vmem:[%s3 + $0x8] sm:$0xf]
  %v586 = vld [vmem:[%s3 + $0xc] sm:$0xf]
  %v587 = vld [vmem:[%s3 + $0x10] sm:$0xf]
  %v588 = vld [vmem:[%s3 + $0x14] sm:$0xf]
  %v589 = vld [vmem:[%s3 + $0x18] sm:$0xf]
  %v590 = vld [vmem:[%s3 + $0x1c] sm:$0xf]
  %v591 = vld [vmem:[%s3 + $0x20] sm:$0xf]
  %v592 = vld [vmem:[%s3 + $0x24] sm:$0xf]
  %v593 = vld [vmem:[%s3 + $0x28] sm:$0xf]
  %v594 = vld [vmem:[%s3 + $0x2c] sm:$0xf]
  %v595 = vld [vmem:[%s3 + $0x30] sm:$0xf]
  %v596 = vld [vmem:[%s3 + $0x34] sm:$0xf]
  %v597 = vld [vmem:[%s3 + $0x38] sm:$0xf]
  %v598 = vld [vmem:[%s3 + $0x3c] sm:$0xf]
  %v599 = vld [vmem:[%s3 + $0x40] sm:$0xf]
  %v600 = vld [vmem:[%s3 + $0x44] sm:$0xf]
  %v601 = vld [vmem:[%s3 + $0x48] sm:$0xf]
  %v602 = vld [vmem:[%s3 + $0x4c] sm:$0xf]
  %v603 = vld [vmem:[%s3 + $0x50] sm:$0xf]
  %v604 = vld [vmem:[%s3 + $0x54] sm:$0xf]
  %v605 = vld [vmem:[%s3 + $0x58] sm:$0xf]
  %v606 = vld [vmem:[%s3 + $0x5c] sm:$0xf]
  %v607 = vld [vmem:[%s6] sm:$0x1]
  %v609 = vlaneseq
  %v610 = vshrl.u32 %v609, 7
  %v611 = vsub.s32 0, %v610
  %v612 = vrot.slane %v607, %v611
  %v638 = vunpack.c.l.b16 %v583
  %v639 = vunpack.c.l.b16 %v584
  %v640 = vunpack.c.l.b16 %v585
  %v641 = vunpack.c.l.b16 %v586
  %v642 = vunpack.c.l.b16 %v587
  %v643 = vunpack.c.l.b16 %v588
  %v644 = vunpack.c.l.b16 %v589
  %v645 = vunpack.c.l.b16 %v590
  %v646 = vunpack.c.l.b16 %v591
  %v647 = vunpack.c.l.b16 %v592
  %v648 = vunpack.c.l.b16 %v593
  %v649 = vunpack.c.l.b16 %v594
  %v650 = vunpack.c.l.b16 %v595
  %v651 = vunpack.c.l.b16 %v596
  %v652 = vunpack.c.l.b16 %v597
  %v653 = vunpack.c.l.b16 %v598
  %v654 = vunpack.c.l.b16 %v599
  %v655 = vunpack.c.l.b16 %v600
  %v656 = vunpack.c.l.b16 %v601
  %v657 = vunpack.c.l.b16 %v602
  %v658 = vunpack.c.l.b16 %v603
  %v659 = vunpack.c.l.b16 %v604
  %v660 = vunpack.c.l.b16 %v605
  %v661 = vunpack.c.l.b16 %v606
  %v662 = vpack.c.b16 %v639, %v638
  %v663 = vpack.c.b16 %v641, %v640
  %v664 = vpack.c.b16 %v643, %v642
  %v665 = vpack.c.b16 %v645, %v644
  %v666 = vpack.c.b16 %v647, %v646
  %v667 = vpack.c.b16 %v649, %v648
  %v668 = vpack.c.b16 %v651, %v650
  %v669 = vpack.c.b16 %v653, %v652
  %v670 = vpack.c.b16 %v655, %v654
  %v671 = vpack.c.b16 %v657, %v656
  %v672 = vpack.c.b16 %v659, %v658
  %v673 = vpack.c.b16 %v661, %v660
  %vm686 = vcmask 523264
  %v688 = vsel %vm686, %v582, 0
  %690 = vmatprep.subr.bf16.mxu0 0
  %691 = vmatpush1.bf16.msra.mxu0 %v669
  %692 = vmatprep.subr.bf16.mxu0 0
  %693 = vmatpush1.bf16.msra.mxu0 %v668
  %694 = vmatprep.subr.bf16.mxu0 0
  %695 = vmatpush1.bf16.msra.mxu0 %v667
  %696 = vmatprep.subr.bf16.mxu0 0
  %697 = vmatpush1.bf16.msra.mxu0 %v666
  %698 = vmatprep.subr.bf16.mxu0 0
  %699 = vmatpush1.bf16.msra.mxu0 %v665
  %700 = vmatprep.subr.bf16.mxu0 0
  %701 = vmatpush1.bf16.msra.mxu0 %v664
  %702 = vmatprep.subr.bf16.mxu0 0
  %703 = vmatpush1.bf16.msra.mxu0 %v663
  %704 = vmatprep.subr.bf16.mxu0 0
  %705 = vmatpush1.bf16.msra.mxu0 %v662
  %706 = vmatprep.subr.bf16.mxu0 0
  %707 = vmatpush2.bf16.msra.mxu0 0
  %708 = vmatprep.subr.bf16.mxu0 0
  %709 = vmatpush2.bf16.msra.mxu0 0
  %710 = vmatprep.subr.bf16.mxu0 0
  %711 = vmatpush2.bf16.msra.mxu0 0
  %712 = vmatprep.subr.bf16.mxu0 0
  %713 = vmatpush2.bf16.msra.mxu0 0
  %714 = vmatprep.subr.bf16.mxu0 0
  %715 = vmatpush2.bf16.msra.mxu0 %v673
  %716 = vmatprep.subr.bf16.mxu0 0
  %717 = vmatpush2.bf16.msra.mxu0 %v672
  %718 = vmatprep.subr.bf16.mxu0 0
  %719 = vmatpush2.bf16.msra.mxu0 %v671
  %720 = vmatprep.subr.bf16.mxu0 0
  %721 = vmatpush2.bf16.msra.mxu0 %v670
  %722 = vmatprep.mubr.bf16.mxu0 %v688
  %723 = vmatmul.mubr.bf16.gmra.mxu0 %v581
  %v724 = vpop.f32.mrf.mxu0
  %v725 = vadd.f32 %v612, %v724
  %v726 = vpop.f32.mrf.mxu0
  %v727 = vpop.f32.mrf.mxu0
  %v728 = vpop.f32.mrf.mxu0
  %729 = vdwg.mxu0
  %vm730 = vcmask 191488
  %731 = vst.msk [vmem:[%s7] sm:$0xf] %vm730, %v725
  // Predicated region
  $region30: #{munet_forward.1} parent=0 // pred_check
    _
  $region31: #{munet_forward.1} parent=0 // pred_check_branch
    %733 = sbr.rel (0) target = $region33
  $region32: #{munet_forward.1} parent=0 // pred_region
    _
  $region33: #{munet_forward.1} parent=0 // pred_fallthru
    _
  // Predicated region
  $region34: #{munet_forward.1} parent=0 // pred_check
    _
  $region35: #{munet_forward.1} parent=0 // pred_check_branch
    %735 = sbr.rel (0) target = $region37
  $region36: #{munet_forward.1} parent=0 // pred_region
    _
  $region37: #{munet_forward.1} parent=0 // pred_fallthru
    _

</llo_original>
